<compile_context>
chip_gen: v5e
topology: v5e:2x2
jax: 0.10.0
libtpu: 0.0.40
codegen_flags: <defaults>
</compile_context>

<pallas_src>
import jax
import jax.numpy as jnp
from jax import lax
from jax.experimental import pallas as pl
from jax.experimental.pallas import tpu as pltpu


def _round_up(x, m):
    return ((x + m - 1) // m) * m


def _make_kernel(tn, vocab, n_valid, needs_mask, compute_loss, unroll):
    """Kernel body for one (tn, vocab) row tile; tn is a multiple of 8."""
    n_strips = tn // 8

    def kernel(*refs):
        if compute_loss:
            ids_ref, tgt_ref, table_ref, logits_ref, loss_ref = refs
        else:
            ids_ref, table_ref, logits_ref = refs

        base = pl.program_id(0) * tn

        # Constant iotas hoisted out of the strip loop (JAX does not CSE
        # broadcast_in_dim inside loops).
        if compute_loss:
            col = lax.broadcasted_iota(jnp.int32, (8, vocab), 1)
            if needs_mask:
                row8 = lax.broadcasted_iota(jnp.int32, (8, 1), 0)

        def strip(s, nll_acc):
            r0 = pl.multiple_of(s * 8, 8)
            # 8-row batched gather: SMEM scalar ids drive dynamic row loads from
            # the resident table; one aligned, unmasked (8, V) store per strip.
            rows = [table_ref[pl.ds(ids_ref[base + r0 + j], 1), :] for j in range(8)]
            block = jnp.concatenate(rows, axis=0)              # (8, V), exact copies
            logits_ref[pl.ds(r0, 8), :] = block

            if not compute_loss:
                return nll_acc

            # Fused CE on the strip already in registers: nll = lse - logit[tgt]
            m = jnp.max(block, axis=-1, keepdims=True)                           # (8,1)
            lse = jnp.log(jnp.sum(jnp.exp(block - m), axis=-1, keepdims=True)) + m
            tgt8 = tgt_ref[pl.ds(r0, 8), :]                                      # (8,1)
            tl = jnp.sum(jnp.where(col == tgt8, block, 0.0),
                         axis=-1, keepdims=True)                                 # (8,1)
            nll = lse - tl                                     # per-row (no cancellation)
            if needs_mask:
                rg = row8 + (base + r0)
                nll = jnp.where(rg < n_valid, nll, 0.0)
            return nll_acc + jnp.sum(nll)

        nll_total = lax.fori_loop(0, n_strips, strip, jnp.float32(0.0), unroll=unroll)

        if compute_loss:
            # Lane-dense (1, 8, 128) partial-NLL block (unmasked store).
            loss_ref[...] = jnp.full(loss_ref.shape, nll_total, dtype=jnp.float32)

    return kernel


def bigram_forward(idx, table, targets=None, *, tile_rows=None):
    """Pallas forward pass of BigramLanguageModel.

    idx:     (B, T) integer token ids
    table:   (V, V) float32 embedding table
    targets: optional (B, T) integer token ids

    Returns (logits, loss):
      targets is None -> logits (B, T, V), loss None
      else            -> logits (B*T, V),  loss scalar   (matches the PyTorch module)
    """
    B, T = idx.shape
    V = int(table.shape[0])
    N = B * T

    table = table.astype(jnp.float32)
    table_bytes = V * V * 4

    # ---- VMEM budgeting (per-TensorCore) ----
    try:
        vmem_cap = int(pltpu.get_tpu_info().vmem_capacity_bytes)
    except Exception:
        vmem_cap = 64 * 1024 * 1024            # conservative default: v7x per-core VMEM
    budget = (vmem_cap * 3) // 4               # headroom for Mosaic internal scratch

    if tile_rows is None:
        # per-row cost: double-buffered f32 logits tile row + lane-padded (tn,1)
        # int32 target block, double-buffered.
        per_row = 2 * V * 4 + 2 * 128 * 4
        avail = budget - table_bytes - 2 * 8 * 128 * 4 - (2 << 20)
        tn = max(8, (avail // per_row) // 8 * 8) if avail > per_row * 8 else 8
        tn = min(tn, 256)                       # bound vreg / temporary pressure
        # keep >= 2 row tiles when N allows so the "parallel" axis can split
        # across both v7x TensorCores
        tn = min(tn, max(8, _round_up(pl.cdiv(N, 2), 8)))
    else:
        tn = max(8, _round_up(int(tile_rows), 8))
    tn = int(tn)

    num_tiles = int(pl.cdiv(N, tn))
    n_pad = num_tiles * tn
    needs_mask = n_pad != N
    compute_loss = targets is not None
    n_strips = tn // 8
    unroll = True if n_strips <= 8 else 8

    ids = idx.reshape(N).astype(jnp.int32)
    if needs_mask:
        ids = jnp.pad(ids, (0, n_pad - N))      # pad with a valid token (0)

    # Explicit scoped-VMEM cap (2*table covers the double-buffered fallback too).
    est_vmem = (2 * table_bytes + 2 * tn * V * 4 + 2 * tn * 128 * 4
                + 2 * 8 * 128 * 4 + (4 << 20))
    compiler_params = pltpu.CompilerParams(
        dimension_semantics=("parallel",),
        vmem_limit_bytes=int(min(vmem_cap, max(est_vmem, 16 * 1024 * 1024))),
    )

    kernel = _make_kernel(tn, V, N, needs_mask, compute_loss, unroll)

    def run(single_buffer_table):
        table_map = lambda i, ids_s: (0, 0)      # constant: table stays resident
        if single_buffer_table:
            table_spec = pl.BlockSpec((V, V), table_map, pipeline_mode=pl.Buffered(1))
        else:
            table_spec = pl.BlockSpec((V, V), table_map)

        if not compute_loss:
            grid_spec = pltpu.PrefetchScalarGridSpec(
                num_scalar_prefetch=1,
                grid=(num_tiles,),
                in_specs=[table_spec],
                out_specs=pl.BlockSpec((tn, V), lambda i, ids_s: (i, 0)),
            )
            return pl.pallas_call(
                kernel,
                grid_spec=grid_spec,
                out_shape=jax.ShapeDtypeStruct((n_pad, V), jnp.float32),
                compiler_params=compiler_params,
            )(ids, table)

        tgt = targets.reshape(N).astype(jnp.int32)
        if needs_mask:
            tgt = jnp.pad(tgt, (0, n_pad - N))
        tgt2d = tgt.reshape(n_pad, 1)
        grid_spec = pltpu.PrefetchScalarGridSpec(
            num_scalar_prefetch=1,
            grid=(num_tiles,),
            in_specs=[pl.BlockSpec((tn, 1), lambda i, ids_s: (i, 0)), table_spec],
            out_specs=(
                pl.BlockSpec((tn, V), lambda i, ids_s: (i, 0)),
                pl.BlockSpec((1, 8, 128), lambda i, ids_s: (i, 0, 0)),
            ),
        )
        return pl.pallas_call(
            kernel,
            grid_spec=grid_spec,
            out_shape=(
                jax.ShapeDtypeStruct((n_pad, V), jnp.float32),
                jax.ShapeDtypeStruct((num_tiles, 8, 128), jnp.float32),
            ),
            compiler_params=compiler_params,
        )(ids, tgt2d, table)

    try:
        out = run(single_buffer_table=True)
    except Exception:
        # Fallback for jax versions without pipeline_mode / Buffered(1) support.
        out = run(single_buffer_table=False)

    if not compute_loss:
        return out[:N].reshape(B, T, V), None

    logits_pad, loss_parts = out
    # Sum of per-tile partial NLL sums divided by the TRUE N (not a mean of means).
    loss = jnp.sum(loss_parts[:, 0, 0]) / jnp.float32(N)
    return logits_pad[:N], loss


if __name__ == "__main__":
    # small deterministic setup: vocab=128 (lane-aligned), batch=2, seq=8
    V, B, T = 128, 2, 8
    key = jax.random.PRNGKey(0)
    k_table, k_idx, k_tgt = jax.random.split(key, 3)

    table = jax.random.normal(k_table, (V, V), dtype=jnp.float32)   # nn.Embedding ~ N(0,1)
    idx = jax.random.randint(k_idx, (B, T), 0, V, dtype=jnp.int32)
    targets = jax.random.randint(k_tgt, (B, T), 0, V, dtype=jnp.int32)

    # --- training path (auto tile size -> 2 row tiles): gather + fused CE ---
    logits, loss = bigram_forward(idx, table, targets)
    jax.block_until_ready((logits, loss))

    ref_logits = table[idx].reshape(B * T, V)
    lp = jax.nn.log_softmax(ref_logits, axis=-1)
    ref_loss = -jnp.mean(lp[jnp.arange(B * T), targets.reshape(-1)])
    assert logits.shape == (B * T, V)
    assert jnp.allclose(logits, ref_logits, atol=1e-5), "logits mismatch"
    assert jnp.allclose(loss, ref_loss, atol=1e-5), "loss mismatch"

    # --- inference path (targets=None): CE skipped entirely ---
    logits_inf, loss_inf = bigram_forward(idx, table)
    jax.block_until_ready(logits_inf)
    assert loss_inf is None
    assert logits_inf.shape == (B, T, V)
    assert jnp.allclose(logits_inf, table[idx], atol=1e-5), "inference logits mismatch"

    # --- ragged path: N=10 not a multiple of the row tile (padding + masking) ---
    idx_r, tgt_r = idx[:, :5], targets[:, :5]
    logits_r, loss_r = bigram_forward(idx_r, table, tgt_r, tile_rows=8)
    jax.block_until_ready((logits_r, loss_r))
    ref_lr = table[idx_r].reshape(-1, V)
    lp_r = jax.nn.log_softmax(ref_lr, axis=-1)
    ref_loss_r = -jnp.mean(lp_r[jnp.arange(ref_lr.shape[0]), tgt_r.reshape(-1)])
    assert jnp.allclose(logits_r, ref_lr, atol=1e-5), "ragged logits mismatch"
    assert jnp.allclose(loss_r, ref_loss_r, atol=1e-5), "ragged loss mismatch"

    print("KERNEL_OK")
</pallas_src>

<mosaic_0001>
module attributes {stable_mosaic.version = 11 : i64} {
  func.func @kernel(%arg0: i32, %arg1: memref<16xi32, #tpu.memory_space<smem>>, %arg2: memref<8x1xi32, #tpu.memory_space<vmem>>, %arg3: memref<128x128xf32, #tpu.memory_space<vmem>>, %arg4: memref<8x128xf32, #tpu.memory_space<vmem>>, %arg5: memref<1x8x128xf32, #tpu.memory_space<vmem>>) attributes {dimension_semantics = [#tpu.dimension_semantics<parallel>], iteration_bounds = array<i64: 2>, scalar_prefetch = 1 : i64, scratch_operands = 0 : i64, tpu.core_type = #tpu.core_type<tc>, window_params = [{transform_indices = @transform_0, window_bounds = array<i64: 8, 1>}, {pipeline_mode = #tpu.pipeline_mode<synchronous>, transform_indices = @transform_1, window_bounds = array<i64: 128, 128>}, {transform_indices = @transform_2, window_bounds = array<i64: 8, 128>}, {transform_indices = @transform_3, window_bounds = array<i64: 1, 8, 128>}]} {
    %c8_i32 = arith.constant 8 : i32
    %0 = arith.muli %arg0, %c8_i32 : i32
    %1 = tpu.iota {dimensions = array<i32: 1>} : vector<8x128xi32>
    %cst = arith.constant 0.000000e+00 : f32
    %c0_i32 = arith.constant 0 : i32
    %c8_i32_0 = arith.constant 8 : i32
    %2 = arith.muli %c0_i32, %c8_i32_0 : i32
    %3 = tpu.assume_multiple %2, 8 : i32
    %4 = arith.addi %0, %3 : i32
    %c0_i32_1 = arith.constant 0 : i32
    %5 = arith.addi %4, %c0_i32_1 : i32
    %6 = arith.index_cast %5 : i32 to index
    %7 = memref.load %arg1[%6] : memref<16xi32, #tpu.memory_space<smem>>
    %8 = arith.index_cast %7 : i32 to index
    %c0 = arith.constant 0 : index
    %9 = vector.load %arg3[%8, %c0] : memref<128x128xf32, #tpu.memory_space<vmem>>, vector<1x128xf32>
    %10 = arith.addi %0, %3 : i32
    %c1_i32 = arith.constant 1 : i32
    %11 = arith.addi %10, %c1_i32 : i32
    %12 = arith.index_cast %11 : i32 to index
    %13 = memref.load %arg1[%12] : memref<16xi32, #tpu.memory_space<smem>>
    %14 = arith.index_cast %13 : i32 to index
    %c0_2 = arith.constant 0 : index
    %15 = vector.load %arg3[%14, %c0_2] : memref<128x128xf32, #tpu.memory_space<vmem>>, vector<1x128xf32>
    %16 = arith.addi %0, %3 : i32
    %c2_i32 = arith.constant 2 : i32
    %17 = arith.addi %16, %c2_i32 : i32
    %18 = arith.index_cast %17 : i32 to index
    %19 = memref.load %arg1[%18] : memref<16xi32, #tpu.memory_space<smem>>
    %20 = arith.index_cast %19 : i32 to index
    %c0_3 = arith.constant 0 : index
    %21 = vector.load %arg3[%20, %c0_3] : memref<128x128xf32, #tpu.memory_space<vmem>>, vector<1x128xf32>
    %22 = arith.addi %0, %3 : i32
    %c3_i32 = arith.constant 3 : i32
    %23 = arith.addi %22, %c3_i32 : i32
    %24 = arith.index_cast %23 : i32 to index
    %25 = memref.load %arg1[%24] : memref<16xi32, #tpu.memory_space<smem>>
    %26 = arith.index_cast %25 : i32 to index
    %c0_4 = arith.constant 0 : index
    %27 = vector.load %arg3[%26, %c0_4] : memref<128x128xf32, #tpu.memory_space<vmem>>, vector<1x128xf32>
    %28 = arith.addi %0, %3 : i32
    %c4_i32 = arith.constant 4 : i32
    %29 = arith.addi %28, %c4_i32 : i32
    %30 = arith.index_cast %29 : i32 to index
    %31 = memref.load %arg1[%30] : memref<16xi32, #tpu.memory_space<smem>>
    %32 = arith.index_cast %31 : i32 to index
    %c0_5 = arith.constant 0 : index
    %33 = vector.load %arg3[%32, %c0_5] : memref<128x128xf32, #tpu.memory_space<vmem>>, vector<1x128xf32>
    %34 = arith.addi %0, %3 : i32
    %c5_i32 = arith.constant 5 : i32
    %35 = arith.addi %34, %c5_i32 : i32
    %36 = arith.index_cast %35 : i32 to index
    %37 = memref.load %arg1[%36] : memref<16xi32, #tpu.memory_space<smem>>
    %38 = arith.index_cast %37 : i32 to index
    %c0_6 = arith.constant 0 : index
    %39 = vector.load %arg3[%38, %c0_6] : memref<128x128xf32, #tpu.memory_space<vmem>>, vector<1x128xf32>
    %40 = arith.addi %0, %3 : i32
    %c6_i32 = arith.constant 6 : i32
    %41 = arith.addi %40, %c6_i32 : i32
    %42 = arith.index_cast %41 : i32 to index
    %43 = memref.load %arg1[%42] : memref<16xi32, #tpu.memory_space<smem>>
    %44 = arith.index_cast %43 : i32 to index
    %c0_7 = arith.constant 0 : index
    %45 = vector.load %arg3[%44, %c0_7] : memref<128x128xf32, #tpu.memory_space<vmem>>, vector<1x128xf32>
    %46 = arith.addi %0, %3 : i32
    %c7_i32 = arith.constant 7 : i32
    %47 = arith.addi %46, %c7_i32 : i32
    %48 = arith.index_cast %47 : i32 to index
    %49 = memref.load %arg1[%48] : memref<16xi32, #tpu.memory_space<smem>>
    %50 = arith.index_cast %49 : i32 to index
    %c0_8 = arith.constant 0 : index
    %51 = vector.load %arg3[%50, %c0_8] : memref<128x128xf32, #tpu.memory_space<vmem>>, vector<1x128xf32>
    %52 = tpu.concatenate %9, %15, %21, %27, %33, %39, %45, %51 in 0 : vector<1x128xf32>, vector<1x128xf32>, vector<1x128xf32>, vector<1x128xf32>, vector<1x128xf32>, vector<1x128xf32>, vector<1x128xf32>, vector<1x128xf32> -> vector<8x128xf32>
    %53 = arith.index_cast %3 : i32 to index
    %c0_9 = arith.constant 0 : index
    %54 = vector.load %arg4[%53, %c0_9] : memref<8x128xf32, #tpu.memory_space<vmem>>, vector<8x128xf32>
    tpu.vector_store %arg4[%53, %c0_9], %52 {strides = array<i32>} : memref<8x128xf32, #tpu.memory_space<vmem>>, vector<8x128xf32>,
    %cst_10 = arith.constant dense<0xFF800000> : vector<8xf32>
    %55 = vector.multi_reduction <maximumf>, %52, %cst_10 [1] : vector<8x128xf32> to vector<8xf32>
    %56 = vector.shape_cast %55 : vector<8xf32> to vector<8x1xf32>
    %57 = vector.broadcast %56 : vector<8x1xf32> to vector<8x128xf32>
    %58 = arith.subf %52, %57 : vector<8x128xf32>
    %59 = math.exp %58 : vector<8x128xf32>
    %cst_11 = arith.constant dense<0.000000e+00> : vector<8xf32>
    %60 = vector.multi_reduction <add>, %59, %cst_11 [1] : vector<8x128xf32> to vector<8xf32>
    %61 = vector.shape_cast %60 : vector<8xf32> to vector<8x1xf32>
    %62 = math.log %61 : vector<8x1xf32>
    %63 = arith.addf %62, %56 : vector<8x1xf32>
    %64 = arith.index_cast %3 : i32 to index
    %c0_12 = arith.constant 0 : index
    %65 = vector.load %arg2[%64, %c0_12] : memref<8x1xi32, #tpu.memory_space<vmem>>, vector<8x1xi32>
    %66 = vector.broadcast %65 : vector<8x1xi32> to vector<8x128xi32>
    %67 = arith.cmpi eq, %1, %66 : vector<8x128xi32>
    %cst_13 = arith.constant 0.000000e+00 : f32
    %68 = vector.broadcast %cst_13 : f32 to vector<8x128xf32>
    %69 = arith.select %67, %52, %68 : vector<8x128xi1>, vector<8x128xf32>
    %cst_14 = arith.constant dense<0.000000e+00> : vector<8xf32>
    %70 = vector.multi_reduction <add>, %69, %cst_14 [1] : vector<8x128xf32> to vector<8xf32>
    %71 = vector.shape_cast %70 : vector<8xf32> to vector<8x1xf32>
    %72 = arith.subf %63, %71 : vector<8x1xf32>
    %73 = vector.shape_cast %72 : vector<8x1xf32> to vector<1x8x1xf32>
    %cst_15 = arith.constant dense<0.000000e+00> : vector<1xf32>
    %74 = vector.multi_reduction <add>, %73, %cst_15 [1, 2] : vector<1x8x1xf32> to vector<1xf32>
    %75 = vector.shape_cast %74 : vector<1xf32> to vector<1x1x1xf32>
    %76 = vector.extract %75[0, 0, 0] : f32 from vector<1x1x1xf32>
    %77 = arith.addf %cst, %76 : f32
    %c1_i32_16 = arith.constant 1 : i32
    %78 = vector.broadcast %77 : f32 to vector<1x8x128xf32>
    %c0_17 = arith.constant 0 : index
    %c0_18 = arith.constant 0 : index
    %c0_19 = arith.constant 0 : index
    %79 = vector.load %arg5[%c0_17, %c0_18, %c0_19] : memref<1x8x128xf32, #tpu.memory_space<vmem>>, vector<1x8x128xf32>
    tpu.vector_store %arg5[%c0_17, %c0_18, %c0_19], %78 {strides = array<i32>} : memref<1x8x128xf32, #tpu.memory_space<vmem>>, vector<1x8x128xf32>,
    return
  }
  func.func @transform_0(%arg0: i32, %arg1: memref<16xi32, #tpu.memory_space<smem>>) -> (i32, i32) {
    %c0_i32 = arith.constant 0 : i32
    %c0_i32_0 = arith.constant 0 : i32
    return %arg0, %c0_i32 : i32, i32
  }
  func.func @transform_1(%arg0: i32, %arg1: memref<16xi32, #tpu.memory_space<smem>>) -> (i32, i32) {
    %c0_i32 = arith.constant 0 : i32
    %c0_i32_0 = arith.constant 0 : i32
    %c0_i32_1 = arith.constant 0 : i32
    return %c0_i32, %c0_i32_0 : i32, i32
  }
  func.func @transform_2(%arg0: i32, %arg1: memref<16xi32, #tpu.memory_space<smem>>) -> (i32, i32) {
    %c0_i32 = arith.constant 0 : i32
    %c0_i32_0 = arith.constant 0 : i32
    return %arg0, %c0_i32 : i32, i32
  }
  func.func @transform_3(%arg0: i32, %arg1: memref<16xi32, #tpu.memory_space<smem>>) -> (i32, i32, i32) {
    %c0_i32 = arith.constant 0 : i32
    %c0_i32_0 = arith.constant 0 : i32
    %c0_i32_1 = arith.constant 0 : i32
    return %arg0, %c0_i32, %c0_i32_0 : i32, i32, i32
  }
}

module attributes {stable_mosaic.version = 11 : i64} {
  func.func @kernel(%arg0: i32, %arg1: memref<16xi32, #tpu.memory_space<smem>>, %arg2: memref<8x1xi32, #tpu.memory_space<vmem>>, %arg3: memref<128x128xf32, #tpu.memory_space<vmem>>, %arg4: memref<8x128xf32, #tpu.memory_space<vmem>>, %arg5: memref<1x8x128xf32, #tpu.memory_space<vmem>>) attributes {dimension_semantics = [#tpu.dimension_semantics<parallel>], iteration_bounds = array<i64: 2>, scalar_prefetch = 1 : i64, scratch_operands = 0 : i64, tpu.core_type = #tpu.core_type<tc>, window_params = [{transform_indices = @transform_0, window_bounds = array<i64: 8, 1>}, {pipeline_mode = #tpu.pipeline_mode<synchronous>, transform_indices = @transform_1, window_bounds = array<i64: 128, 128>}, {transform_indices = @transform_2, window_bounds = array<i64: 8, 128>}, {transform_indices = @transform_3, window_bounds = array<i64: 1, 8, 128>}]} {
    %c8_i32 = arith.constant 8 : i32
    %0 = arith.muli %arg0, %c8_i32 : i32
    %1 = tpu.iota {dimensions = array<i32: 1>} : vector<8x128xi32>
    %cst = arith.constant 0.000000e+00 : f32
    %c0_i32 = arith.constant 0 : i32
    %c8_i32_0 = arith.constant 8 : i32
    %2 = arith.muli %c0_i32, %c8_i32_0 : i32
    %3 = tpu.assume_multiple %2, 8 : i32
    %4 = arith.addi %0, %3 : i32
    %c0_i32_1 = arith.constant 0 : i32
    %5 = arith.addi %4, %c0_i32_1 : i32
    %6 = arith.index_cast %5 : i32 to index
    %7 = memref.load %arg1[%6] : memref<16xi32, #tpu.memory_space<smem>>
    %8 = arith.index_cast %7 : i32 to index
    %c0 = arith.constant 0 : index
    %9 = vector.load %arg3[%8, %c0] : memref<128x128xf32, #tpu.memory_space<vmem>>, vector<1x128xf32>
    %10 = arith.addi %0, %3 : i32
    %c1_i32 = arith.constant 1 : i32
    %11 = arith.addi %10, %c1_i32 : i32
    %12 = arith.index_cast %11 : i32 to index
    %13 = memref.load %arg1[%12] : memref<16xi32, #tpu.memory_space<smem>>
    %14 = arith.index_cast %13 : i32 to index
    %c0_2 = arith.constant 0 : index
    %15 = vector.load %arg3[%14, %c0_2] : memref<128x128xf32, #tpu.memory_space<vmem>>, vector<1x128xf32>
    %16 = arith.addi %0, %3 : i32
    %c2_i32 = arith.constant 2 : i32
    %17 = arith.addi %16, %c2_i32 : i32
    %18 = arith.index_cast %17 : i32 to index
    %19 = memref.load %arg1[%18] : memref<16xi32, #tpu.memory_space<smem>>
    %20 = arith.index_cast %19 : i32 to index
    %c0_3 = arith.constant 0 : index
    %21 = vector.load %arg3[%20, %c0_3] : memref<128x128xf32, #tpu.memory_space<vmem>>, vector<1x128xf32>
    %22 = arith.addi %0, %3 : i32
    %c3_i32 = arith.constant 3 : i32
    %23 = arith.addi %22, %c3_i32 : i32
    %24 = arith.index_cast %23 : i32 to index
    %25 = memref.load %arg1[%24] : memref<16xi32, #tpu.memory_space<smem>>
    %26 = arith.index_cast %25 : i32 to index
    %c0_4 = arith.constant 0 : index
    %27 = vector.load %arg3[%26, %c0_4] : memref<128x128xf32, #tpu.memory_space<vmem>>, vector<1x128xf32>
    %28 = arith.addi %0, %3 : i32
    %c4_i32 = arith.constant 4 : i32
    %29 = arith.addi %28, %c4_i32 : i32
    %30 = arith.index_cast %29 : i32 to index
    %31 = memref.load %arg1[%30] : memref<16xi32, #tpu.memory_space<smem>>
    %32 = arith.index_cast %31 : i32 to index
    %c0_5 = arith.constant 0 : index
    %33 = vector.load %arg3[%32, %c0_5] : memref<128x128xf32, #tpu.memory_space<vmem>>, vector<1x128xf32>
    %34 = arith.addi %0, %3 : i32
    %c5_i32 = arith.constant 5 : i32
    %35 = arith.addi %34, %c5_i32 : i32
    %36 = arith.index_cast %35 : i32 to index
    %37 = memref.load %arg1[%36] : memref<16xi32, #tpu.memory_space<smem>>
    %38 = arith.index_cast %37 : i32 to index
    %c0_6 = arith.constant 0 : index
    %39 = vector.load %arg3[%38, %c0_6] : memref<128x128xf32, #tpu.memory_space<vmem>>, vector<1x128xf32>
    %40 = arith.addi %0, %3 : i32
    %c6_i32 = arith.constant 6 : i32
    %41 = arith.addi %40, %c6_i32 : i32
    %42 = arith.index_cast %41 : i32 to index
    %43 = memref.load %arg1[%42] : memref<16xi32, #tpu.memory_space<smem>>
    %44 = arith.index_cast %43 : i32 to index
    %c0_7 = arith.constant 0 : index
    %45 = vector.load %arg3[%44, %c0_7] : memref<128x128xf32, #tpu.memory_space<vmem>>, vector<1x128xf32>
    %46 = arith.addi %0, %3 : i32
    %c7_i32 = arith.constant 7 : i32
    %47 = arith.addi %46, %c7_i32 : i32
    %48 = arith.index_cast %47 : i32 to index
    %49 = memref.load %arg1[%48] : memref<16xi32, #tpu.memory_space<smem>>
    %50 = arith.index_cast %49 : i32 to index
    %c0_8 = arith.constant 0 : index
    %51 = vector.load %arg3[%50, %c0_8] : memref<128x128xf32, #tpu.memory_space<vmem>>, vector<1x128xf32>
    %52 = tpu.concatenate %9, %15, %21, %27, %33, %39, %45, %51 in 0 : vector<1x128xf32>, vector<1x128xf32>, vector<1x128xf32>, vector<1x128xf32>, vector<1x128xf32>, vector<1x128xf32>, vector<1x128xf32>, vector<1x128xf32> -> vector<8x128xf32>
    %53 = arith.index_cast %3 : i32 to index
    %c0_9 = arith.constant 0 : index
    %54 = vector.load %arg4[%53, %c0_9] : memref<8x128xf32, #tpu.memory_space<vmem>>, vector<8x128xf32>
    tpu.vector_store %arg4[%53, %c0_9], %52 {strides = array<i32>} : memref<8x128xf32, #tpu.memory_space<vmem>>, vector<8x128xf32>,
    %cst_10 = arith.constant dense<0xFF800000> : vector<8xf32>
    %55 = vector.multi_reduction <maximumf>, %52, %cst_10 [1] : vector<8x128xf32> to vector<8xf32>
    %56 = vector.shape_cast %55 : vector<8xf32> to vector<8x1xf32>
    %57 = vector.broadcast %56 : vector<8x1xf32> to vector<8x128xf32>
    %58 = arith.subf %52, %57 : vector<8x128xf32>
    %59 = math.exp %58 : vector<8x128xf32>
    %cst_11 = arith.constant dense<0.000000e+00> : vector<8xf32>
    %60 = vector.multi_reduction <add>, %59, %cst_11 [1] : vector<8x128xf32> to vector<8xf32>
    %61 = vector.shape_cast %60 : vector<8xf32> to vector<8x1xf32>
    %62 = math.log %61 : vector<8x1xf32>
    %63 = arith.addf %62, %56 : vector<8x1xf32>
    %64 = arith.index_cast %3 : i32 to index
    %c0_12 = arith.constant 0 : index
    %65 = vector.load %arg2[%64, %c0_12] : memref<8x1xi32, #tpu.memory_space<vmem>>, vector<8x1xi32>
    %66 = vector.broadcast %65 : vector<8x1xi32> to vector<8x128xi32>
    %67 = arith.cmpi eq, %1, %66 : vector<8x128xi32>
    %cst_13 = arith.constant 0.000000e+00 : f32
    %68 = vector.broadcast %cst_13 : f32 to vector<8x128xf32>
    %69 = arith.select %67, %52, %68 : vector<8x128xi1>, vector<8x128xf32>
    %cst_14 = arith.constant dense<0.000000e+00> : vector<8xf32>
    %70 = vector.multi_reduction <add>, %69, %cst_14 [1] : vector<8x128xf32> to vector<8xf32>
    %71 = vector.shape_cast %70 : vector<8xf32> to vector<8x1xf32>
    %72 = arith.subf %63, %71 : vector<8x1xf32>
    %73 = vector.shape_cast %72 : vector<8x1xf32> to vector<1x8x1xf32>
    %cst_15 = arith.constant dense<0.000000e+00> : vector<1xf32>
    %74 = vector.multi_reduction <add>, %73, %cst_15 [1, 2] : vector<1x8x1xf32> to vector<1xf32>
    %75 = vector.shape_cast %74 : vector<1xf32> to vector<1x1x1xf32>
    %76 = vector.extract %75[0, 0, 0] : f32 from vector<1x1x1xf32>
    %77 = arith.addf %cst, %76 : f32
    %c1_i32_16 = arith.constant 1 : i32
    %78 = vector.broadcast %77 : f32 to vector<1x8x128xf32>
    %c0_17 = arith.constant 0 : index
    %c0_18 = arith.constant 0 : index
    %c0_19 = arith.constant 0 : index
    %79 = vector.load %arg5[%c0_17, %c0_18, %c0_19] : memref<1x8x128xf32, #tpu.memory_space<vmem>>, vector<1x8x128xf32>
    tpu.vector_store %arg5[%c0_17, %c0_18, %c0_19], %78 {strides = array<i32>} : memref<1x8x128xf32, #tpu.memory_space<vmem>>, vector<1x8x128xf32>,
    return
  }
  func.func @transform_0(%arg0: i32, %arg1: memref<16xi32, #tpu.memory_space<smem>>) -> (i32, i32) {
    %c0_i32 = arith.constant 0 : i32
    %c0_i32_0 = arith.constant 0 : i32
    return %arg0, %c0_i32 : i32, i32
  }
  func.func @transform_1(%arg0: i32, %arg1: memref<16xi32, #tpu.memory_space<smem>>) -> (i32, i32) {
    %c0_i32 = arith.constant 0 : i32
    %c0_i32_0 = arith.constant 0 : i32
    %c0_i32_1 = arith.constant 0 : i32
    return %c0_i32, %c0_i32_0 : i32, i32
  }
  func.func @transform_2(%arg0: i32, %arg1: memref<16xi32, #tpu.memory_space<smem>>) -> (i32, i32) {
    %c0_i32 = arith.constant 0 : i32
    %c0_i32_0 = arith.constant 0 : i32
    return %arg0, %c0_i32 : i32, i32
  }
  func.func @transform_3(%arg0: i32, %arg1: memref<16xi32, #tpu.memory_space<smem>>) -> (i32, i32, i32) {
    %c0_i32 = arith.constant 0 : i32
    %c0_i32_0 = arith.constant 0 : i32
    %c0_i32_1 = arith.constant 0 : i32
    return %arg0, %c0_i32, %c0_i32_0 : i32, i32, i32
  }
}

</mosaic_0001>

<llo_original>
// kernel: tpu_custom_call.1
$region0: #{tpu_custom_call.1}
  #allocation0 [shape = 'u32[]', space=smem, size = 0x4, offset = 0x4, fixed_abs, tag = 'smem constant byte address 0x4 - core index']
  #allocation1 [shape = 'u32[72,128]{1,0:T(1,128)}', space=vmem, size = 0x9000, scoped, tag = 'internal scratch']
  #allocation2 [shape = 's32[1]{0}', space=sflag, size = 0x4, scoped, tag = 'scoped memory for tpu_custom_call.1']
  #allocation3 [shape = 'u8[512]{0}', space=smem, size = 0x200, scoped, tag = 'prefetched SMEM operand 0']
  %s0 = inlined_call_operand.vmem [shape: s32[16], index: 0, kind: input, shape index: {}]
  %s1 = inlined_call_operand.vmem [shape: s32[16,1], index: 1, kind: input, shape index: {}]
  %s2 = inlined_call_operand.hbm [shape: f32[128,128], index: 2, kind: input, shape index: {}]
  %s3 = inlined_call_operand.hbm [shape: f32[16,128], index: 3, kind: output, shape index: {0}]
  %s4 = inlined_call_operand.hbm [shape: f32[2,8,128], index: 4, kind: output, shape index: {1}]
  %5 = xla_tuple %s3, %s4
  %s6 = sld [smem:[#allocation0]]
  $region53: #{tpu_custom_call.1} parent=0
    _
  %s8 = ssub.s32 1, %s6
  %s9 = scalar_select 0, %s8, %s6
  %s11 = sshll.u32 %s0, 4
  %s12 = int_to_ptr.vmem [resolvable:$true] %s11
  %14 = dma.vmem_to_smem %s12, 16, [#allocation3], [#allocation2]
  %16 = dma.done [#allocation2], 16
  %17 = sfence
  $region1: #{tpu_custom_call.1} parent=0
    #allocation4 [shape = 'u8[65536]{0}', space=vmem, size = 0x10000, scoped, tag = 'input window, operand 2, single buffered']
    #allocation5 [shape = 's32[2]{0}', space=sflag, size = 0x8, scoped, tag = 'scoped memory for tpu_custom_call.1']
    #allocation6 [shape = 's32[2]{0}', space=sflag, size = 0x8, scoped, tag = 'scoped memory for tpu_custom_call.1']
    #allocation7 [shape = 'u8[8192]{0}', space=vmem, size = 0x2000, scoped, tag = 'output window, operand 0']
    #allocation8 [shape = 'u8[8192]{0}', space=vmem, size = 0x2000, scoped, tag = 'output window, operand 1']
    #allocation9 [shape = 's32[2]{0}', space=sflag, size = 0x8, scoped, tag = 'scoped memory for tpu_custom_call.1']
    %18 = vsyncpa [#allocation5], 0
    %19 = vsyncpa [#allocation6], 0
    %s20 = scalar_lea.sflag [#allocation6], 1
    %21 = vsyncpa %s20, 0
    %22 = vsyncpa [#allocation9], 0
    %s23 = scalar_lea.sflag [#allocation9], 1
    %24 = vsyncpa %s23, 0
    loop: start=0, step=1, limit=4
    $region2: #{tpu_custom_call.1} parent=1 // loop_pre_header
      _
    $region3: #{tpu_custom_call.1} parent=1 // loop_header
      %s26 = sphi 0, %s30
      %p27 = scmp.ge.s32.totalorder %s26, 4
      %s36 = sphi 0, %s38
      %s39 = sphi 0, %s36
      %s40 = sphi 0, %s39
      %s56 = sphi 0, %s40
      %s60 = sphi 0, %s60
      %s62 = sphi 0, %s60
      %s63 = sphi 0, %s62
      %s77 = sphi 0, %s63
      %s83 = sphi 0, %s85
      %s86 = sphi 0, %s83
      %s87 = sphi 0, %s86
      %s103 = sphi 0, %s87
      %s109 = sphi 0, %s111
      %s112 = sphi 0, %s109
      %s113 = sphi 0, %s112
      %s129 = sphi 0, %s113
    $region4: #{tpu_custom_call.1} parent=1 // loop_header_branch
      %29 = sbr.rel (%p27) target = $region8
    $region5: #{tpu_custom_call.1} parent=1 // loop_body
      %s31 = ssub.s32 %s26, 1
      %s32 = ssub.s32 %s26, 2
      %s33 = sadd.s32 %s26, 1
      %s34 = ssub.s32 %s26, %s33
      %p35 = scmp.eq.s32.totalorder %s34, 0
      %s37 = sadd.s32 %s36, 1
      %s38 = scalar_select %p35, %s36, %s37
      %p41 = pneg %p35
      %p42 = scmp.eq.s32.totalorder %s26, 1
      %p43 = por %p41, %p42
      %p44 = scmp.ne.s32.totalorder %s36, %s39
      %p45 = scmp.eq.s32.totalorder %s26, 0
      %p46 = por %p44, %p45
      %p47 = scmp.ne.s32.totalorder %s36, %s39
      %p48 = scmp.eq.s32.totalorder %s31, 1
      %p49 = por %p47, %p48
      %p50 = scmp.ne.s32.totalorder %s39, %s40
      %p51 = scmp.eq.s32.totalorder %s31, 0
      %p52 = por %p50, %p51
      %p53 = scmp.ne.s32.totalorder %s39, %s40
      %p54 = scmp.eq.s32.totalorder %s32, 1
      %p55 = por %p53, %p54
      %p57 = scmp.ne.s32.totalorder %s40, %s56
      %p58 = scmp.eq.s32.totalorder %s32, 0
      %p59 = por %p57, %p58
      %s61 = sadd.s32 %s60, 1
      %p64 = scmp.eq.s32.totalorder %s26, 1
      %p65 = scmp.ne.s32.totalorder %s60, %s62
      %p66 = scmp.eq.s32.totalorder %s26, 0
      %p67 = por %p65, %p66
      %p68 = scmp.ne.s32.totalorder %s60, %s62
      %p69 = scmp.eq.s32.totalorder %s31, 1
      %p70 = por %p68, %p69
      %p71 = scmp.ne.s32.totalorder %s62, %s63
      %p72 = scmp.eq.s32.totalorder %s31, 0
      %p73 = por %p71, %p72
      %p74 = scmp.ne.s32.totalorder %s62, %s63
      %p75 = scmp.eq.s32.totalorder %s32, 1
      %p76 = por %p74, %p75
      %p78 = scmp.ne.s32.totalorder %s63, %s77
      %p79 = scmp.eq.s32.totalorder %s32, 0
      %p80 = por %p78, %p79
      %s81 = ssub.s32 %s26, %s33
      %p82 = scmp.eq.s32.totalorder %s81, 0
      %s84 = sadd.s32 %s83, 1
      %s85 = scalar_select %p82, %s83, %s84
      %p88 = pneg %p82
      %p89 = scmp.eq.s32.totalorder %s26, 1
      %p90 = por %p88, %p89
      %p91 = scmp.ne.s32.totalorder %s83, %s86
      %p92 = scmp.eq.s32.totalorder %s26, 0
      %p93 = por %p91, %p92
      %p94 = scmp.ne.s32.totalorder %s83, %s86
      %p95 = scmp.eq.s32.totalorder %s31, 1
      %p96 = por %p94, %p95
      %p97 = scmp.ne.s32.totalorder %s86, %s87
      %p98 = scmp.eq.s32.totalorder %s31, 0
      %p99 = por %p97, %p98
      %p100 = scmp.ne.s32.totalorder %s86, %s87
      %p101 = scmp.eq.s32.totalorder %s32, 1
      %p102 = por %p100, %p101
      %p104 = scmp.ne.s32.totalorder %s87, %s103
      %p105 = scmp.eq.s32.totalorder %s32, 0
      %p106 = por %p104, %p105
      %s107 = ssub.s32 %s26, %s33
      %p108 = scmp.eq.s32.totalorder %s107, 0
      %s110 = sadd.s32 %s109, 1
      %s111 = scalar_select %p108, %s109, %s110
      %p114 = pneg %p108
      %p115 = scmp.eq.s32.totalorder %s26, 1
      %p116 = por %p114, %p115
      %p117 = scmp.ne.s32.totalorder %s109, %s112
      %p118 = scmp.eq.s32.totalorder %s26, 0
      %p119 = por %p117, %p118
      %p120 = scmp.ne.s32.totalorder %s109, %s112
      %p121 = scmp.eq.s32.totalorder %s31, 1
      %p122 = por %p120, %p121
      %p123 = scmp.ne.s32.totalorder %s112, %s113
      %p124 = scmp.eq.s32.totalorder %s31, 0
      %p125 = por %p123, %p124
      %p126 = scmp.ne.s32.totalorder %s112, %s113
      %p127 = scmp.eq.s32.totalorder %s32, 1
      %p128 = por %p126, %p127
      %p130 = scmp.ne.s32.totalorder %s113, %s129
      %p131 = scmp.eq.s32.totalorder %s32, 0
      %p132 = por %p130, %p131
      %p133 = scmp.le.s32.totalorder 1, %s26
      %p134 = scmp.lt.s32.totalorder %s26, 3
      %p135 = pnand %p133, %p134
      %p136 = pneg %p135
      // Predicated region
      $region9: #{tpu_custom_call.1} parent=5 // pred_check
        _
      $region10: #{tpu_custom_call.1} parent=5 // pred_check_branch
        %138 = sbr.rel (%p135) target = $region12
      $region11: #{tpu_custom_call.1} parent=5 // pred_region
        %s139 = ssub.s32 %s26, 1
        // Predicated region
        $region13: #{tpu_custom_call.1} parent=11 // pred_check
          %p140 = pneg %p73
        $region14: #{tpu_custom_call.1} parent=11 // pred_check_branch
          %142 = sbr.rel (%p140) target = $region16
        $region15: #{tpu_custom_call.1} parent=11 // pred_region
          %144 = vsyncadd [#allocation5], 0
          %s145 = sshll.u32 %s2, 4
          %s146 = int_to_ptr.hbm [resolvable:$true] %s145
          %s147 = sshll.u32 [#allocation4], 4
          %s148 = int_to_ptr.vmem [resolvable:$true] %s147
          %153 = dma.hbm_to_vmem [thread:$0]  %s146, 2048, %s148, [#allocation5], 128, 128, 8
        $region16: #{tpu_custom_call.1} parent=11 // pred_fallthru
          _
      $region12: #{tpu_custom_call.1} parent=5 // pred_fallthru
        _
      %p154 = scmp.lt.s32.totalorder %s26, 2
      // Predicated region
      $region17: #{tpu_custom_call.1} parent=5 // pred_check
        %p155 = pneg %p154
      $region18: #{tpu_custom_call.1} parent=5 // pred_check_branch
        %157 = sbr.rel (%p155) target = $region20
      $region19: #{tpu_custom_call.1} parent=5 // pred_region
        // Predicated region
        $region21: #{tpu_custom_call.1} parent=19 // pred_check
          %p158 = pneg %p46
        $region22: #{tpu_custom_call.1} parent=19 // pred_check_branch
          %160 = sbr.rel (%p158) target = $region24
        $region23: #{tpu_custom_call.1} parent=19 // pred_region
          %p161 = scmp.lt.s32.totalorder %s26, 1
          %s162 = scalar_select %p161, %s26, 1
          %s163 = smul.addr %s162, 8
          %s164 = scalar_lea.vmem %s1, %s163
        $region24: #{tpu_custom_call.1} parent=19 // pred_fallthru
          _
      $region20: #{tpu_custom_call.1} parent=5 // pred_fallthru
        _
      %p165 = scmp.le.s32.totalorder 1, %s26
      %p166 = scmp.lt.s32.totalorder %s26, 3
      %p167 = pnand %p165, %p166
      %p168 = pneg %p167
      // Predicated region
      $region25: #{tpu_custom_call.1} parent=5 // pred_check
        _
      $region26: #{tpu_custom_call.1} parent=5 // pred_check_branch
        %170 = sbr.rel (%p167) target = $region28
      $region27: #{tpu_custom_call.1} parent=5 // pred_region
        %s171 = ssub.s32 %s26, 1
        // Predicated region
        $region29: #{tpu_custom_call.1} parent=27 // pred_check
          %p172 = pneg %p73
        $region30: #{tpu_custom_call.1} parent=27 // pred_check_branch
          %174 = sbr.rel (%p172) target = $region32
        $region31: #{tpu_custom_call.1} parent=27 // pred_region
          %176 = dma.done [#allocation5], 2048
        $region32: #{tpu_custom_call.1} parent=27 // pred_fallthru
          _
        %p177 = scmp.lt.s32.totalorder %s31, 1
        %s178 = scalar_select %p177, %s31, 1
        %s179 = smul.addr %s178, 8
        %s180 = scalar_lea.vmem %s1, %s179
        %p181 = pneg %p52
        %p182 = pneg %p49
        %p183 = pneg %p73
        %p184 = pneg %p70
        %p185 = pneg %p99
        %p186 = pneg %p96
        %s187 = sand.u32 %s86, 1
        %s188 = scalar_lea.sflag [#allocation6], %s187
        %s189 = sand.u32 %s86, 1
        %s190 = smul.addr %s189, 8
        %s191 = scalar_lea.vmem [#allocation7], %s190
        %p192 = pneg %p125
        %p193 = pneg %p122
        %s194 = sand.u32 %s112, 1
        %s195 = scalar_lea.sflag [#allocation9], %s194
        %s196 = sand.u32 %s112, 1
        %s197 = smul.addr %s196, 8
        %s198 = scalar_lea.vmem [#allocation8], %s197
        %p199 = scmp.lt.s32.totalorder %s31, 1
        %s200 = scalar_select %p199, %s31, 1
        %s201 = smul.addr %s200, 8
        %s202 = scalar_lea.vmem %s1, %s201
        %s203 = smul.u32 %s31, 8
        %v204 = vlaneseq
        %v205 = vand.u32 %v204, 127
        %s206 = sadd.s32 %s203, 0
        %s207 = sld [smem:[#allocation3 + %s206]]
        %s208 = scalar_lea.vmem [#allocation4], %s207
        %v209 = vld [vmem:[%s208] sm:$0x1]
        %s210 = sadd.s32 %s206, 1
        %s211 = sld [smem:[#allocation3 + %s210]]
        %s212 = scalar_lea.vmem [#allocation4], %s211
        %v213 = vld [vmem:[%s212] sm:$0x1]
        %s214 = sadd.s32 %s206, 2
        %s215 = sld [smem:[#allocation3 + %s214]]
        %s216 = scalar_lea.vmem [#allocation4], %s215
        %v217 = vld [vmem:[%s216] sm:$0x1]
        %s218 = sadd.s32 %s206, 3
        %s219 = sld [smem:[#allocation3 + %s218]]
        %s220 = scalar_lea.vmem [#allocation4], %s219
        %v221 = vld [vmem:[%s220] sm:$0x1]
        %s222 = sadd.s32 %s206, 4
        %s223 = sld [smem:[#allocation3 + %s222]]
        %s224 = scalar_lea.vmem [#allocation4], %s223
        %v225 = vld [vmem:[%s224] sm:$0x1]
        %s226 = sadd.s32 %s206, 5
        %s227 = sld [smem:[#allocation3 + %s226]]
        %s228 = scalar_lea.vmem [#allocation4], %s227
        %v229 = vld [vmem:[%s228] sm:$0x1]
        %s230 = sadd.s32 %s206, 6
        %s231 = sld [smem:[#allocation3 + %s230]]
        %s232 = scalar_lea.vmem [#allocation4], %s231
        %v233 = vld [vmem:[%s232] sm:$0x1]
        %s234 = sadd.s32 %s206, 7
        %s235 = sld [smem:[#allocation3 + %s234]]
        %s236 = scalar_lea.vmem [#allocation4], %s235
        %v237 = vld [vmem:[%s236] sm:$0x1]
        %v239 = vrot.slane %v213, 7
        %v242 = vrot.slane %v217, 6
        %v245 = vrot.slane %v221, 5
        %v248 = vrot.slane %v225, 4
        %v251 = vrot.slane %v229, 3
        %v254 = vrot.slane %v233, 2
        %v257 = vrot.slane %v237, 1
        %vm259 = vcmask 1040384
        %v260 = vsel %vm259, %v209, %v239
        %vm261 = vcmask 1041408
        %v262 = vsel %vm261, %v260, %v242
        %vm263 = vcmask 1042432
        %v264 = vsel %vm263, %v262, %v245
        %vm265 = vcmask 1043456
        %v266 = vsel %vm265, %v264, %v248
        %vm267 = vcmask 1044480
        %v268 = vsel %vm267, %v266, %v251
        %vm269 = vcmask 1045504
        %v270 = vsel %vm269, %v268, %v254
        %vm271 = vcmask 1046528
        %v272 = vsel %vm271, %v270, %v257
        %273 = vst [vmem:[%s191] sm:$0xff] %v272
        %274 = vmax.xlane.f32.xlu0 %v272
        %v275 = vpop.xlane.xlu0 %274
        %v276 = vsub.f32 %v272, %v275
        %v277 = vmul.f32 %v276, 1.442695
        %v278 = vpow.pop %v277
        %279 = vadd.xlane.f32.xlu0 %v278
        %v280 = vpop.xlane.xlu0 %279
        %v281 = vlog2.pop %v280
        %v282 = vmul.f32 %v281, 0.6931472
        %v283 = vadd.f32 %v282, %v275
        %v284 = vld [vmem:[%s202] sm:$0xff]
        %285 = vset.pattern.permute.xlu0 0
        %286 = vperm.xlu0 %285, %v284
        %v287 = vpop.permute.xlu0 %286
        %vm288 = vcmp.eq.s32.totalorder %v205, %v287
        %v289 = vsel %vm288, %v272, 0.0
        %290 = vadd.xlane.f32.xlu0 %v289
        %v291 = vpop.xlane.xlu0 %290
        %v292 = vsub.f32 %v283, %v291
        %vm293 = vcmask 7168
        %v294 = vsel %vm293, %v292, 0.0
        %295 = vadd.xlane.f32.xlu0 %v294
        %v296 = vpop.xlane.xlu0 %295
        %v297 = vrot.slane %v296, 4
        %v298 = vadd.f32 %v296, %v297
        %v299 = vrot.slane %v298, 2
        %v300 = vadd.f32 %v298, %v299
        %v301 = vrot.slane %v300, 1
        %v302 = vadd.f32 %v300, %v301
        %s303 = vtos %v302
        %s304 = sadd.f32 %s303, 0.0
        %v305 = vstv %s304
        %306 = vst [vmem:[%s198] sm:$0xff] %v305
        %s307 = sand.u32 %s86, 1
        %s308 = scalar_lea.sflag [#allocation6], %s307
        %s309 = sand.u32 %s86, 1
        %s310 = smul.addr %s309, 8
        %s311 = scalar_lea.vmem [#allocation7], %s310
        %s312 = sand.u32 %s112, 1
        %s313 = scalar_lea.sflag [#allocation9], %s312
        %s314 = sand.u32 %s112, 1
        %s315 = smul.addr %s314, 8
        %s316 = scalar_lea.vmem [#allocation8], %s315
        // Predicated region
        $region33: #{tpu_custom_call.1} parent=27 // pred_check
          %p317 = pneg %p96
        $region34: #{tpu_custom_call.1} parent=27 // pred_check_branch
          %319 = sbr.rel (%p317) target = $region36
        $region35: #{tpu_custom_call.1} parent=27 // pred_region
          %321 = vsyncadd %s308, 0
          %s322 = smul.addr %s31, 8
          %s323 = scalar_lea.hbm %s3, %s322
          %s325 = sshll.u32 %s311, 4
          %s326 = int_to_ptr.vmem [resolvable:$true] %s325
          %s327 = sshll.u32 %s323, 4
          %s328 = int_to_ptr.hbm [resolvable:$true] %s327
          %330 = dma.vmem_to_hbm [thread:$0]  %s326, 128, %s328, %s308
        $region36: #{tpu_custom_call.1} parent=27 // pred_fallthru
          _
        // Predicated region
        $region37: #{tpu_custom_call.1} parent=27 // pred_check
          %p331 = pneg %p122
        $region38: #{tpu_custom_call.1} parent=27 // pred_check_branch
          %333 = sbr.rel (%p331) target = $region40
        $region39: #{tpu_custom_call.1} parent=27 // pred_region
          %335 = vsyncadd %s313, 0
          %s336 = smul.addr %s31, 8
          %s337 = scalar_lea.hbm %s4, %s336
          %s339 = sshll.u32 %s316, 4
          %s340 = int_to_ptr.vmem [resolvable:$true] %s339
          %s341 = sshll.u32 %s337, 4
          %s342 = int_to_ptr.hbm [resolvable:$true] %s341
          %344 = dma.vmem_to_hbm [thread:$0]  %s340, 128, %s342, %s313
        $region40: #{tpu_custom_call.1} parent=27 // pred_fallthru
          _
      $region28: #{tpu_custom_call.1} parent=5 // pred_fallthru
        _
      %p345 = scmp.le.s32.totalorder 2, %s26
      // Predicated region
      $region41: #{tpu_custom_call.1} parent=5 // pred_check
        %p346 = pneg %p345
      $region42: #{tpu_custom_call.1} parent=5 // pred_check_branch
        %348 = sbr.rel (%p346) target = $region44
      $region43: #{tpu_custom_call.1} parent=5 // pred_region
        %s349 = ssub.s32 %s26, 2
        // Predicated region
        $region45: #{tpu_custom_call.1} parent=43 // pred_check
          %p350 = pneg %p102
        $region46: #{tpu_custom_call.1} parent=43 // pred_check_branch
          %352 = sbr.rel (%p350) target = $region48
        $region47: #{tpu_custom_call.1} parent=43 // pred_region
          %s353 = sand.u32 %s87, 1
          %s354 = scalar_lea.sflag [#allocation6], %s353
          %s355 = sand.u32 %s87, 1
          %s356 = smul.addr %s355, 8
          %s357 = scalar_lea.vmem [#allocation7], %s356
          %359 = dma.done %s354, 128
        $region48: #{tpu_custom_call.1} parent=43 // pred_fallthru
          _
        // Predicated region
        $region49: #{tpu_custom_call.1} parent=43 // pred_check
          %p360 = pneg %p128
        $region50: #{tpu_custom_call.1} parent=43 // pred_check_branch
          %362 = sbr.rel (%p360) target = $region52
        $region51: #{tpu_custom_call.1} parent=43 // pred_region
          %s363 = sand.u32 %s113, 1
          %s364 = scalar_lea.sflag [#allocation9], %s363
          %s365 = sand.u32 %s113, 1
          %s366 = smul.addr %s365, 8
          %s367 = scalar_lea.vmem [#allocation8], %s366
          %369 = dma.done %s364, 128
        $region52: #{tpu_custom_call.1} parent=43 // pred_fallthru
          _
      $region44: #{tpu_custom_call.1} parent=5 // pred_fallthru
        _
    $region6: #{tpu_custom_call.1} parent=1 // loop_footer
      %s30 = sadd.s32 1, %s26
    $region7: #{tpu_custom_call.1} parent=1 // loop_footer_branch
      %25 = sbr.rel target = $region3
    $region8: #{tpu_custom_call.1} parent=1 // loop_exit
      _
    %370 = vsyncpa [#allocation5], 1
    %s371 = scalar_lea.sflag [#allocation5], 1
    %372 = vsyncpa %s371, 1
    %373 = vsyncpa [#allocation6], 1
    %s374 = scalar_lea.sflag [#allocation6], 1
    %375 = vsyncpa %s374, 1
    %376 = vsyncpa [#allocation9], 1
    %s377 = scalar_lea.sflag [#allocation9], 1
    %378 = vsyncpa %s377, 1

// kernel: tpu_custom_call.1
$region0: #{tpu_custom_call.1}
  #allocation0 [shape = 'u32[]', space=smem, size = 0x4, offset = 0x4, fixed_abs, tag = 'smem constant byte address 0x4 - core index']
  #allocation1 [shape = 'u32[72,128]{1,0:T(1,128)}', space=vmem, size = 0x9000, scoped, tag = 'internal scratch']
  #allocation2 [shape = 's32[1]{0}', space=sflag, size = 0x4, scoped, tag = 'scoped memory for tpu_custom_call.1']
  #allocation3 [shape = 'u8[512]{0}', space=smem, size = 0x200, scoped, tag = 'prefetched SMEM operand 0']
  %s0 = inlined_call_operand.vmem [shape: s32[16], index: 0, kind: input, shape index: {}]
  %s1 = inlined_call_operand.vmem [shape: s32[16,1], index: 1, kind: input, shape index: {}]
  %s2 = inlined_call_operand.hbm [shape: f32[128,128], index: 2, kind: input, shape index: {}]
  %s3 = inlined_call_operand.hbm [shape: f32[16,128], index: 3, kind: output, shape index: {0}]
  %s4 = inlined_call_operand.hbm [shape: f32[2,8,128], index: 4, kind: output, shape index: {1}]
  %5 = xla_tuple %s3, %s4
  %s6 = sld [smem:[#allocation0]]
  $region53: #{tpu_custom_call.1} parent=0
    _
  %s8 = ssub.s32 1, %s6
  %s9 = scalar_select 0, %s8, %s6
  %s11 = sshll.u32 %s0, 4
  %s12 = int_to_ptr.vmem [resolvable:$true] %s11
  %14 = dma.vmem_to_smem %s12, 16, [#allocation3], [#allocation2]
  %16 = dma.done [#allocation2], 16
  %17 = sfence
  $region1: #{tpu_custom_call.1} parent=0
    #allocation4 [shape = 'u8[65536]{0}', space=vmem, size = 0x10000, scoped, tag = 'input window, operand 2, single buffered']
    #allocation5 [shape = 's32[2]{0}', space=sflag, size = 0x8, scoped, tag = 'scoped memory for tpu_custom_call.1']
    #allocation6 [shape = 's32[2]{0}', space=sflag, size = 0x8, scoped, tag = 'scoped memory for tpu_custom_call.1']
    #allocation7 [shape = 'u8[8192]{0}', space=vmem, size = 0x2000, scoped, tag = 'output window, operand 0']
    #allocation8 [shape = 'u8[8192]{0}', space=vmem, size = 0x2000, scoped, tag = 'output window, operand 1']
    #allocation9 [shape = 's32[2]{0}', space=sflag, size = 0x8, scoped, tag = 'scoped memory for tpu_custom_call.1']
    %18 = vsyncpa [#allocation5], 0
    %19 = vsyncpa [#allocation6], 0
    %s20 = scalar_lea.sflag [#allocation6], 1
    %21 = vsyncpa %s20, 0
    %22 = vsyncpa [#allocation9], 0
    %s23 = scalar_lea.sflag [#allocation9], 1
    %24 = vsyncpa %s23, 0
    loop: start=0, step=1, limit=4
    $region2: #{tpu_custom_call.1} parent=1 // loop_pre_header
      _
    $region3: #{tpu_custom_call.1} parent=1 // loop_header
      %s26 = sphi 0, %s30
      %p27 = scmp.ge.s32.totalorder %s26, 4
      %s36 = sphi 0, %s38
      %s39 = sphi 0, %s36
      %s40 = sphi 0, %s39
      %s56 = sphi 0, %s40
      %s60 = sphi 0, %s60
      %s62 = sphi 0, %s60
      %s63 = sphi 0, %s62
      %s77 = sphi 0, %s63
      %s83 = sphi 0, %s85
      %s86 = sphi 0, %s83
      %s87 = sphi 0, %s86
      %s103 = sphi 0, %s87
      %s109 = sphi 0, %s111
      %s112 = sphi 0, %s109
      %s113 = sphi 0, %s112
      %s129 = sphi 0, %s113
    $region4: #{tpu_custom_call.1} parent=1 // loop_header_branch
      %29 = sbr.rel (%p27) target = $region8
    $region5: #{tpu_custom_call.1} parent=1 // loop_body
      %s31 = ssub.s32 %s26, 1
      %s32 = ssub.s32 %s26, 2
      %s33 = sadd.s32 %s26, 1
      %s34 = ssub.s32 %s26, %s33
      %p35 = scmp.eq.s32.totalorder %s34, 0
      %s37 = sadd.s32 %s36, 1
      %s38 = scalar_select %p35, %s36, %s37
      %p41 = pneg %p35
      %p42 = scmp.eq.s32.totalorder %s26, 1
      %p43 = por %p41, %p42
      %p44 = scmp.ne.s32.totalorder %s36, %s39
      %p45 = scmp.eq.s32.totalorder %s26, 0
      %p46 = por %p44, %p45
      %p47 = scmp.ne.s32.totalorder %s36, %s39
      %p48 = scmp.eq.s32.totalorder %s31, 1
      %p49 = por %p47, %p48
      %p50 = scmp.ne.s32.totalorder %s39, %s40
      %p51 = scmp.eq.s32.totalorder %s31, 0
      %p52 = por %p50, %p51
      %p53 = scmp.ne.s32.totalorder %s39, %s40
      %p54 = scmp.eq.s32.totalorder %s32, 1
      %p55 = por %p53, %p54
      %p57 = scmp.ne.s32.totalorder %s40, %s56
      %p58 = scmp.eq.s32.totalorder %s32, 0
      %p59 = por %p57, %p58
      %s61 = sadd.s32 %s60, 1
      %p64 = scmp.eq.s32.totalorder %s26, 1
      %p65 = scmp.ne.s32.totalorder %s60, %s62
      %p66 = scmp.eq.s32.totalorder %s26, 0
      %p67 = por %p65, %p66
      %p68 = scmp.ne.s32.totalorder %s60, %s62
      %p69 = scmp.eq.s32.totalorder %s31, 1
      %p70 = por %p68, %p69
      %p71 = scmp.ne.s32.totalorder %s62, %s63
      %p72 = scmp.eq.s32.totalorder %s31, 0
      %p73 = por %p71, %p72
      %p74 = scmp.ne.s32.totalorder %s62, %s63
      %p75 = scmp.eq.s32.totalorder %s32, 1
      %p76 = por %p74, %p75
      %p78 = scmp.ne.s32.totalorder %s63, %s77
      %p79 = scmp.eq.s32.totalorder %s32, 0
      %p80 = por %p78, %p79
      %s81 = ssub.s32 %s26, %s33
      %p82 = scmp.eq.s32.totalorder %s81, 0
      %s84 = sadd.s32 %s83, 1
      %s85 = scalar_select %p82, %s83, %s84
      %p88 = pneg %p82
      %p89 = scmp.eq.s32.totalorder %s26, 1
      %p90 = por %p88, %p89
      %p91 = scmp.ne.s32.totalorder %s83, %s86
      %p92 = scmp.eq.s32.totalorder %s26, 0
      %p93 = por %p91, %p92
      %p94 = scmp.ne.s32.totalorder %s83, %s86
      %p95 = scmp.eq.s32.totalorder %s31, 1
      %p96 = por %p94, %p95
      %p97 = scmp.ne.s32.totalorder %s86, %s87
      %p98 = scmp.eq.s32.totalorder %s31, 0
      %p99 = por %p97, %p98
      %p100 = scmp.ne.s32.totalorder %s86, %s87
      %p101 = scmp.eq.s32.totalorder %s32, 1
      %p102 = por %p100, %p101
      %p104 = scmp.ne.s32.totalorder %s87, %s103
      %p105 = scmp.eq.s32.totalorder %s32, 0
      %p106 = por %p104, %p105
      %s107 = ssub.s32 %s26, %s33
      %p108 = scmp.eq.s32.totalorder %s107, 0
      %s110 = sadd.s32 %s109, 1
      %s111 = scalar_select %p108, %s109, %s110
      %p114 = pneg %p108
      %p115 = scmp.eq.s32.totalorder %s26, 1
      %p116 = por %p114, %p115
      %p117 = scmp.ne.s32.totalorder %s109, %s112
      %p118 = scmp.eq.s32.totalorder %s26, 0
      %p119 = por %p117, %p118
      %p120 = scmp.ne.s32.totalorder %s109, %s112
      %p121 = scmp.eq.s32.totalorder %s31, 1
      %p122 = por %p120, %p121
      %p123 = scmp.ne.s32.totalorder %s112, %s113
      %p124 = scmp.eq.s32.totalorder %s31, 0
      %p125 = por %p123, %p124
      %p126 = scmp.ne.s32.totalorder %s112, %s113
      %p127 = scmp.eq.s32.totalorder %s32, 1
      %p128 = por %p126, %p127
      %p130 = scmp.ne.s32.totalorder %s113, %s129
      %p131 = scmp.eq.s32.totalorder %s32, 0
      %p132 = por %p130, %p131
      %p133 = scmp.le.s32.totalorder 1, %s26
      %p134 = scmp.lt.s32.totalorder %s26, 3
      %p135 = pnand %p133, %p134
      %p136 = pneg %p135
      // Predicated region
      $region9: #{tpu_custom_call.1} parent=5 // pred_check
        _
      $region10: #{tpu_custom_call.1} parent=5 // pred_check_branch
        %138 = sbr.rel (%p135) target = $region12
      $region11: #{tpu_custom_call.1} parent=5 // pred_region
        %s139 = ssub.s32 %s26, 1
        // Predicated region
        $region13: #{tpu_custom_call.1} parent=11 // pred_check
          %p140 = pneg %p73
        $region14: #{tpu_custom_call.1} parent=11 // pred_check_branch
          %142 = sbr.rel (%p140) target = $region16
        $region15: #{tpu_custom_call.1} parent=11 // pred_region
          %144 = vsyncadd [#allocation5], 0
          %s145 = sshll.u32 %s2, 4
          %s146 = int_to_ptr.hbm [resolvable:$true] %s145
          %s147 = sshll.u32 [#allocation4], 4
          %s148 = int_to_ptr.vmem [resolvable:$true] %s147
          %153 = dma.hbm_to_vmem [thread:$0]  %s146, 2048, %s148, [#allocation5], 128, 128, 8
        $region16: #{tpu_custom_call.1} parent=11 // pred_fallthru
          _
      $region12: #{tpu_custom_call.1} parent=5 // pred_fallthru
        _
      %p154 = scmp.lt.s32.totalorder %s26, 2
      // Predicated region
      $region17: #{tpu_custom_call.1} parent=5 // pred_check
        %p155 = pneg %p154
      $region18: #{tpu_custom_call.1} parent=5 // pred_check_branch
        %157 = sbr.rel (%p155) target = $region20
      $region19: #{tpu_custom_call.1} parent=5 // pred_region
        // Predicated region
        $region21: #{tpu_custom_call.1} parent=19 // pred_check
          %p158 = pneg %p46
        $region22: #{tpu_custom_call.1} parent=19 // pred_check_branch
          %160 = sbr.rel (%p158) target = $region24
        $region23: #{tpu_custom_call.1} parent=19 // pred_region
          %p161 = scmp.lt.s32.totalorder %s26, 1
          %s162 = scalar_select %p161, %s26, 1
          %s163 = smul.addr %s162, 8
          %s164 = scalar_lea.vmem %s1, %s163
        $region24: #{tpu_custom_call.1} parent=19 // pred_fallthru
          _
      $region20: #{tpu_custom_call.1} parent=5 // pred_fallthru
        _
      %p165 = scmp.le.s32.totalorder 1, %s26
      %p166 = scmp.lt.s32.totalorder %s26, 3
      %p167 = pnand %p165, %p166
      %p168 = pneg %p167
      // Predicated region
      $region25: #{tpu_custom_call.1} parent=5 // pred_check
        _
      $region26: #{tpu_custom_call.1} parent=5 // pred_check_branch
        %170 = sbr.rel (%p167) target = $region28
      $region27: #{tpu_custom_call.1} parent=5 // pred_region
        %s171 = ssub.s32 %s26, 1
        // Predicated region
        $region29: #{tpu_custom_call.1} parent=27 // pred_check
          %p172 = pneg %p73
        $region30: #{tpu_custom_call.1} parent=27 // pred_check_branch
          %174 = sbr.rel (%p172) target = $region32
        $region31: #{tpu_custom_call.1} parent=27 // pred_region
          %176 = dma.done [#allocation5], 2048
        $region32: #{tpu_custom_call.1} parent=27 // pred_fallthru
          _
        %p177 = scmp.lt.s32.totalorder %s31, 1
        %s178 = scalar_select %p177, %s31, 1
        %s179 = smul.addr %s178, 8
        %s180 = scalar_lea.vmem %s1, %s179
        %p181 = pneg %p52
        %p182 = pneg %p49
        %p183 = pneg %p73
        %p184 = pneg %p70
        %p185 = pneg %p99
        %p186 = pneg %p96
        %s187 = sand.u32 %s86, 1
        %s188 = scalar_lea.sflag [#allocation6], %s187
        %s189 = sand.u32 %s86, 1
        %s190 = smul.addr %s189, 8
        %s191 = scalar_lea.vmem [#allocation7], %s190
        %p192 = pneg %p125
        %p193 = pneg %p122
        %s194 = sand.u32 %s112, 1
        %s195 = scalar_lea.sflag [#allocation9], %s194
        %s196 = sand.u32 %s112, 1
        %s197 = smul.addr %s196, 8
        %s198 = scalar_lea.vmem [#allocation8], %s197
        %p199 = scmp.lt.s32.totalorder %s31, 1
        %s200 = scalar_select %p199, %s31, 1
        %s201 = smul.addr %s200, 8
        %s202 = scalar_lea.vmem %s1, %s201
        %s203 = smul.u32 %s31, 8
        %v204 = vlaneseq
        %v205 = vand.u32 %v204, 127
        %s206 = sadd.s32 %s203, 0
        %s207 = sld [smem:[#allocation3 + %s206]]
        %s208 = scalar_lea.vmem [#allocation4], %s207
        %v209 = vld [vmem:[%s208] sm:$0x1]
        %s210 = sadd.s32 %s206, 1
        %s211 = sld [smem:[#allocation3 + %s210]]
        %s212 = scalar_lea.vmem [#allocation4], %s211
        %v213 = vld [vmem:[%s212] sm:$0x1]
        %s214 = sadd.s32 %s206, 2
        %s215 = sld [smem:[#allocation3 + %s214]]
        %s216 = scalar_lea.vmem [#allocation4], %s215
        %v217 = vld [vmem:[%s216] sm:$0x1]
        %s218 = sadd.s32 %s206, 3
        %s219 = sld [smem:[#allocation3 + %s218]]
        %s220 = scalar_lea.vmem [#allocation4], %s219
        %v221 = vld [vmem:[%s220] sm:$0x1]
        %s222 = sadd.s32 %s206, 4
        %s223 = sld [smem:[#allocation3 + %s222]]
        %s224 = scalar_lea.vmem [#allocation4], %s223
        %v225 = vld [vmem:[%s224] sm:$0x1]
        %s226 = sadd.s32 %s206, 5
        %s227 = sld [smem:[#allocation3 + %s226]]
        %s228 = scalar_lea.vmem [#allocation4], %s227
        %v229 = vld [vmem:[%s228] sm:$0x1]
        %s230 = sadd.s32 %s206, 6
        %s231 = sld [smem:[#allocation3 + %s230]]
        %s232 = scalar_lea.vmem [#allocation4], %s231
        %v233 = vld [vmem:[%s232] sm:$0x1]
        %s234 = sadd.s32 %s206, 7
        %s235 = sld [smem:[#allocation3 + %s234]]
        %s236 = scalar_lea.vmem [#allocation4], %s235
        %v237 = vld [vmem:[%s236] sm:$0x1]
        %v239 = vrot.slane %v213, 7
        %v242 = vrot.slane %v217, 6
        %v245 = vrot.slane %v221, 5
        %v248 = vrot.slane %v225, 4
        %v251 = vrot.slane %v229, 3
        %v254 = vrot.slane %v233, 2
        %v257 = vrot.slane %v237, 1
        %vm259 = vcmask 1040384
        %v260 = vsel %vm259, %v209, %v239
        %vm261 = vcmask 1041408
        %v262 = vsel %vm261, %v260, %v242
        %vm263 = vcmask 1042432
        %v264 = vsel %vm263, %v262, %v245
        %vm265 = vcmask 1043456
        %v266 = vsel %vm265, %v264, %v248
        %vm267 = vcmask 1044480
        %v268 = vsel %vm267, %v266, %v251
        %vm269 = vcmask 1045504
        %v270 = vsel %vm269, %v268, %v254
        %vm271 = vcmask 1046528
        %v272 = vsel %vm271, %v270, %v257
        %273 = vst [vmem:[%s191] sm:$0xff] %v272
        %274 = vmax.xlane.f32.xlu0 %v272
        %v275 = vpop.xlane.xlu0 %274
        %v276 = vsub.f32 %v272, %v275
        %v277 = vmul.f32 %v276, 1.442695
        %v278 = vpow.pop %v277
        %279 = vadd.xlane.f32.xlu0 %v278
        %v280 = vpop.xlane.xlu0 %279
        %v281 = vlog2.pop %v280
        %v282 = vmul.f32 %v281, 0.6931472
        %v283 = vadd.f32 %v282, %v275
        %v284 = vld [vmem:[%s202] sm:$0xff]
        %285 = vset.pattern.permute.xlu0 0
        %286 = vperm.xlu0 %285, %v284
        %v287 = vpop.permute.xlu0 %286
        %vm288 = vcmp.eq.s32.totalorder %v205, %v287
        %v289 = vsel %vm288, %v272, 0.0
        %290 = vadd.xlane.f32.xlu0 %v289
        %v291 = vpop.xlane.xlu0 %290
        %v292 = vsub.f32 %v283, %v291
        %vm293 = vcmask 7168
        %v294 = vsel %vm293, %v292, 0.0
        %295 = vadd.xlane.f32.xlu0 %v294
        %v296 = vpop.xlane.xlu0 %295
        %v297 = vrot.slane %v296, 4
        %v298 = vadd.f32 %v296, %v297
        %v299 = vrot.slane %v298, 2
        %v300 = vadd.f32 %v298, %v299
        %v301 = vrot.slane %v300, 1
        %v302 = vadd.f32 %v300, %v301
        %s303 = vtos %v302
        %s304 = sadd.f32 %s303, 0.0
        %v305 = vstv %s304
        %306 = vst [vmem:[%s198] sm:$0xff] %v305
        %s307 = sand.u32 %s86, 1
        %s308 = scalar_lea.sflag [#allocation6], %s307
        %s309 = sand.u32 %s86, 1
        %s310 = smul.addr %s309, 8
        %s311 = scalar_lea.vmem [#allocation7], %s310
        %s312 = sand.u32 %s112, 1
        %s313 = scalar_lea.sflag [#allocation9], %s312
        %s314 = sand.u32 %s112, 1
        %s315 = smul.addr %s314, 8
        %s316 = scalar_lea.vmem [#allocation8], %s315
        // Predicated region
        $region33: #{tpu_custom_call.1} parent=27 // pred_check
          %p317 = pneg %p96
        $region34: #{tpu_custom_call.1} parent=27 // pred_check_branch
          %319 = sbr.rel (%p317) target = $region36
        $region35: #{tpu_custom_call.1} parent=27 // pred_region
          %321 = vsyncadd %s308, 0
          %s322 = smul.addr %s31, 8
          %s323 = scalar_lea.hbm %s3, %s322
          %s325 = sshll.u32 %s311, 4
          %s326 = int_to_ptr.vmem [resolvable:$true] %s325
          %s327 = sshll.u32 %s323, 4
          %s328 = int_to_ptr.hbm [resolvable:$true] %s327
          %330 = dma.vmem_to_hbm [thread:$0]  %s326, 128, %s328, %s308
        $region36: #{tpu_custom_call.1} parent=27 // pred_fallthru
          _
        // Predicated region
        $region37: #{tpu_custom_call.1} parent=27 // pred_check
          %p331 = pneg %p122
        $region38: #{tpu_custom_call.1} parent=27 // pred_check_branch
          %333 = sbr.rel (%p331) target = $region40
        $region39: #{tpu_custom_call.1} parent=27 // pred_region
          %335 = vsyncadd %s313, 0
          %s336 = smul.addr %s31, 8
          %s337 = scalar_lea.hbm %s4, %s336
          %s339 = sshll.u32 %s316, 4
          %s340 = int_to_ptr.vmem [resolvable:$true] %s339
          %s341 = sshll.u32 %s337, 4
          %s342 = int_to_ptr.hbm [resolvable:$true] %s341
          %344 = dma.vmem_to_hbm [thread:$0]  %s340, 128, %s342, %s313
        $region40: #{tpu_custom_call.1} parent=27 // pred_fallthru
          _
      $region28: #{tpu_custom_call.1} parent=5 // pred_fallthru
        _
      %p345 = scmp.le.s32.totalorder 2, %s26
      // Predicated region
      $region41: #{tpu_custom_call.1} parent=5 // pred_check
        %p346 = pneg %p345
      $region42: #{tpu_custom_call.1} parent=5 // pred_check_branch
        %348 = sbr.rel (%p346) target = $region44
      $region43: #{tpu_custom_call.1} parent=5 // pred_region
        %s349 = ssub.s32 %s26, 2
        // Predicated region
        $region45: #{tpu_custom_call.1} parent=43 // pred_check
          %p350 = pneg %p102
        $region46: #{tpu_custom_call.1} parent=43 // pred_check_branch
          %352 = sbr.rel (%p350) target = $region48
        $region47: #{tpu_custom_call.1} parent=43 // pred_region
          %s353 = sand.u32 %s87, 1
          %s354 = scalar_lea.sflag [#allocation6], %s353
          %s355 = sand.u32 %s87, 1
          %s356 = smul.addr %s355, 8
          %s357 = scalar_lea.vmem [#allocation7], %s356
          %359 = dma.done %s354, 128
        $region48: #{tpu_custom_call.1} parent=43 // pred_fallthru
          _
        // Predicated region
        $region49: #{tpu_custom_call.1} parent=43 // pred_check
          %p360 = pneg %p128
        $region50: #{tpu_custom_call.1} parent=43 // pred_check_branch
          %362 = sbr.rel (%p360) target = $region52
        $region51: #{tpu_custom_call.1} parent=43 // pred_region
          %s363 = sand.u32 %s113, 1
          %s364 = scalar_lea.sflag [#allocation9], %s363
          %s365 = sand.u32 %s113, 1
          %s366 = smul.addr %s365, 8
          %s367 = scalar_lea.vmem [#allocation8], %s366
          %369 = dma.done %s364, 128
        $region52: #{tpu_custom_call.1} parent=43 // pred_fallthru
          _
      $region44: #{tpu_custom_call.1} parent=5 // pred_fallthru
        _
    $region6: #{tpu_custom_call.1} parent=1 // loop_footer
      %s30 = sadd.s32 1, %s26
    $region7: #{tpu_custom_call.1} parent=1 // loop_footer_branch
      %25 = sbr.rel target = $region3
    $region8: #{tpu_custom_call.1} parent=1 // loop_exit
      _
    %370 = vsyncpa [#allocation5], 1
    %s371 = scalar_lea.sflag [#allocation5], 1
    %372 = vsyncpa %s371, 1
    %373 = vsyncpa [#allocation6], 1
    %s374 = scalar_lea.sflag [#allocation6], 1
    %375 = vsyncpa %s374, 1
    %376 = vsyncpa [#allocation9], 1
    %s377 = scalar_lea.sflag [#allocation9], 1
    %378 = vsyncpa %s377, 1

</llo_original>
